<compile_context>
chip_gen: v7x
topology: tpu7x:2x2x1
jax: 0.10.0
libtpu: 0.0.40
codegen_flags: <defaults>
</compile_context>

<pallas_src>
import functools
import math

import jax
import jax.numpy as jnp
from jax.experimental import pallas as pl
from jax.experimental.pallas import tpu as pltpu

_LANE = 128


def _make_divisible(v, divisor, min_value=None):
    if min_value is None:
        min_value = divisor
    new_v = max(min_value, int(v + divisor / 2) // divisor * divisor)
    if new_v < 0.9 * v:
        new_v += divisor
    return new_v


def _round_up(x, m):
    return (x + m - 1) // m * m


def _vmem_capacity_bytes():
    """Per-TensorCore VMEM capacity; conservative (v7x-sized) fallback."""
    try:
        info = pltpu.get_tpu_info()
        for name in ("vmem_capacity_bytes", "vmem_bytes", "vmem_size_bytes"):
            v = getattr(info, name, None)
            if v:
                return int(v)
    except Exception:
        pass
    return 64 << 20


def _needs_f32_rescale():
    """v5e and older have no bf16 VALU -> keep the streaming multiply in f32."""
    try:
        kind = jax.devices()[0].device_kind.lower()
    except Exception:
        return True
    return any(t in kind for t in ("v2", "v3", "v4", "v5"))


# ---------------------------------------------------------------------------
# Fused single-pass kernel: one grid step does sum + gate + rescale for a
# whole batch tile.  Used whenever the (C, HW_pad) slab fits the VMEM budget.
# ---------------------------------------------------------------------------
def _se_kernel_fused(x_ref, w1t_ref, b1_ref, w2t_ref, b2_ref, o_ref,
                     *, inv_hw, low_precision_rescale):
    x = x_ref[...]                                              # (Bt, C, HWp)
    # Squeeze: spatial mean, accumulated in f32 regardless of input dtype.
    pooled = jnp.sum(x.astype(jnp.float32), axis=-1) * inv_hw   # (Bt, C)
    # Excite: FC -> SiLU -> FC -> sigmoid.  Weights are pre-transposed in the
    # wrapper so both matmuls produce lane-dense (Bt, N) results on the MXU.
    h = jnp.dot(pooled, w1t_ref[...],
                preferred_element_type=jnp.float32) + b1_ref[...]   # (Bt, hidden)
    h = h * jax.nn.sigmoid(h)                                       # SiLU
    s = jnp.dot(h, w2t_ref[...],
                preferred_element_type=jnp.float32) + b2_ref[...]   # (Bt, C)
    gate = jax.nn.sigmoid(s)                                        # (Bt, C)
    # Rescale (streaming, lane-dense store).
    if low_precision_rescale:
        o_ref[...] = (x * gate[:, :, None].astype(x.dtype)).astype(o_ref.dtype)
    else:
        o_ref[...] = (x.astype(jnp.float32) * gate[:, :, None]).astype(o_ref.dtype)


# ---------------------------------------------------------------------------
# Chunked two-pass kernel: grid (batch, 2*K).  Only used when the full slab
# does not fit the VMEM budget (K >= 2), i.e. very large HW -- there the tiny
# per-batch gate matvec is negligible vs. the two streaming passes, so its
# N=1 MXU shape is not worth complicating.
# ---------------------------------------------------------------------------
def _se_kernel_chunked(x_ref, w1_ref, b1_ref, w2_ref, b2_ref, o_ref,
                       acc_ref, gate_ref, *, inv_hw, n_hw_blocks,
                       low_precision_rescale):
    k = pl.program_id(1)
    K = n_hw_blocks

    @pl.when(k == 0)
    def _zero_acc():
        acc_ref[...] = jnp.zeros_like(acc_ref)

    @pl.when(k < K)
    def _accumulate():
        # Pass 1: spatial sum of the current HW chunk, kept as a (C, 1)
        # column so the reduction result stays on sublanes.
        x = x_ref[0].astype(jnp.float32)                        # (C, T_hw)
        acc_ref[...] += jnp.sum(x, axis=-1, keepdims=True)      # (C, 1)

    @pl.when(k == K)
    def _gate():
        # NOTE: gate_ref is written here and read by _rescale in the SAME grid
        # step; this relies on @pl.when blocks executing in program order
        # (stateful data dependence through gate_ref) -- keep this ordering.
        pooled = acc_ref[...] * inv_hw                          # (C, 1)
        h = jnp.dot(w1_ref[...], pooled,
                    preferred_element_type=jnp.float32) + b1_ref[...]  # (hidden, 1)
        h = h * jax.nn.sigmoid(h)                               # SiLU
        s = jnp.dot(w2_ref[...], h,
                    preferred_element_type=jnp.float32) + b2_ref[...]  # (C, 1)
        gate_ref[...] = jax.nn.sigmoid(s)                       # (C, 1)

    @pl.when(k >= K)
    def _rescale():
        # Pass 2: channel-wise rescale of the chunk, lane-dense store.
        # NOTE: during pass 1 the output block maps to chunk 0 but is never
        # written; correctness relies on Pallas only writing back an output
        # block when its block index changes.
        if low_precision_rescale:
            o_ref[0] = (x_ref[0] * gate_ref[...].astype(o_ref.dtype)
                        ).astype(o_ref.dtype)
        else:
            o_ref[0] = (x_ref[0].astype(jnp.float32) * gate_ref[...]
                        ).astype(o_ref.dtype)


def se_layer(x, w1, b1, w2, b2, *, slab_target_bytes=None, batch_tile_cap=32):
    """SELayer forward.

    x : (B, C, H, W)
    w1: (hidden, C), b1: (hidden,)   -- first nn.Linear (PyTorch layout)
    w2: (C, hidden), b2: (C,)        -- second nn.Linear (PyTorch layout)
    """
    B, C, H, W = x.shape
    HW = H * W
    hidden = w1.shape[0]
    itemsize = jnp.dtype(x.dtype).itemsize
    # Budget VMEM at f32-equivalent size so in-kernel f32 temporaries always fit.
    plan_itemsize = max(itemsize, 4)

    # Generation-aware VMEM budget: ~48 MiB on v7x (64 MiB/TC), ~112 MiB on
    # v5e/v6e (128 MiB) -- leaves headroom for Mosaic internal scratch.
    vmem_cap = _vmem_capacity_bytes()
    vmem_budget = int(min(vmem_cap - (16 << 20), vmem_cap * 7 // 8))
    vmem_budget = max(vmem_budget, 16 << 20)

    # Weights live in f32 in-kernel and are (by default) double-buffered;
    # account for them when sizing the x/out slabs.
    w_bytes = 4 * (w1.size + w2.size + b1.size + b2.size)
    if slab_target_bytes is None:
        # (in + out) x 2 buffers = 4 slabs + weights + headroom.
        slab_target_bytes = max(1 << 20,
                                (vmem_budget - 2 * w_bytes - (4 << 20)) // 4)

    hw_lane = _round_up(HW, _LANE)
    slab_bytes = C * hw_lane * plan_itemsize

    low_precision_rescale = (x.dtype != jnp.float32) and not _needs_f32_rescale()

    # =======================================================================
    # Path A: fused single pass (slab fits) with batch tiling.
    # =======================================================================
    if slab_bytes <= slab_target_bytes:
        bt = max(1, min(B, batch_tile_cap, slab_target_bytes // slab_bytes))
        if B >= 2:
            # Keep >= 2 parallel grid steps so the v7x two-TC split has work
            # on both cores.  (With B == 1 one core idles; splitting HW across
            # cores is possible but not worth it for this layer.)
            bt = min(bt, -(-B // 2))
        B_pad = _round_up(B, bt)

        x3 = x.reshape(B, C, HW)
        pad_hw = hw_lane - HW
        pad_b = B_pad - B
        if pad_hw or pad_b:
            # Zero padding never perturbs the sum; the mean divides by true HW
            # and padded batch rows are sliced off afterwards.
            x3 = jnp.pad(x3, ((0, pad_b), (0, 0), (0, pad_hw)))

        w1t = jnp.transpose(w1).astype(jnp.float32)       # (C, hidden)
        w2t = jnp.transpose(w2).astype(jnp.float32)       # (hidden, C)
        b1r = b1.reshape(1, hidden).astype(jnp.float32)
        b2r = b2.reshape(1, C).astype(jnp.float32)

        kernel = functools.partial(
            _se_kernel_fused, inv_hw=1.0 / HW,
            low_precision_rescale=low_precision_rescale)

        x_bytes = B_pad * C * hw_lane * itemsize
        cost = pl.CostEstimate(
            flops=int(2 * B_pad * C * hw_lane + 4 * B_pad * C * hidden),
            transcendentals=int(B_pad * (2 * hidden + C)),
            bytes_accessed=int(2 * x_bytes + 2 * w_bytes),
        )

        out = pl.pallas_call(
            kernel,
            out_shape=jax.ShapeDtypeStruct((B_pad, C, hw_lane), x.dtype),
            grid_spec=pltpu.PrefetchScalarGridSpec(
                num_scalar_prefetch=0,
                grid=(B_pad // bt,),
                in_specs=[
                    pl.BlockSpec((bt, C, hw_lane), lambda i: (i, 0, 0)),
                    pl.BlockSpec(w1t.shape, lambda i: (0, 0)),
                    pl.BlockSpec(b1r.shape, lambda i: (0, 0)),
                    pl.BlockSpec(w2t.shape, lambda i: (0, 0)),
                    pl.BlockSpec(b2r.shape, lambda i: (0, 0)),
                ],
                out_specs=pl.BlockSpec((bt, C, hw_lane), lambda i: (i, 0, 0)),
            ),
            compiler_params=pltpu.CompilerParams(
                dimension_semantics=("parallel",),
                vmem_limit_bytes=vmem_budget,
            ),
            cost_estimate=cost,
        )(x3, w1t, b1r, w2t, b2r)

        return out[:B, :, :HW].reshape(B, C, H, W)

    # =======================================================================
    # Path B: chunked two passes (very large feature maps only, K >= 2).
    # =======================================================================
    max_t = max(_LANE,
                (slab_target_bytes // (C * plan_itemsize)) // _LANE * _LANE)
    t_hw = min(hw_lane, max_t)
    hw_pad = _round_up(HW, t_hw)
    K = hw_pad // t_hw

    x3 = x.reshape(B, C, HW)
    if hw_pad != HW:
        x3 = jnp.pad(x3, ((0, 0), (0, 0), (0, hw_pad - HW)))

    w1f = w1.astype(jnp.float32)                    # (hidden, C)
    w2f = w2.astype(jnp.float32)                    # (C, hidden)
    b1c = b1.reshape(hidden, 1).astype(jnp.float32)
    b2c = b2.reshape(C, 1).astype(jnp.float32)

    kernel = functools.partial(
        _se_kernel_chunked, inv_hw=1.0 / HW, n_hw_blocks=K,
        low_precision_rescale=low_precision_rescale)

    x_bytes = B * C * hw_pad * itemsize
    cost = pl.CostEstimate(
        flops=int(2 * B * C * hw_pad + 4 * B * C * hidden),
        transcendentals=int(B * (2 * hidden + C)),
        bytes_accessed=int(3 * x_bytes + 2 * w_bytes),
    )

    out = pl.pallas_call(
        kernel,
        out_shape=jax.ShapeDtypeStruct((B, C, hw_pad), x.dtype),
        grid_spec=pltpu.PrefetchScalarGridSpec(
            num_scalar_prefetch=0,
            grid=(B, 2 * K),
            in_specs=[
                pl.BlockSpec((1, C, t_hw), lambda b, k: (b, 0, k % K)),
                pl.BlockSpec(w1f.shape, lambda b, k: (0, 0)),
                pl.BlockSpec(b1c.shape, lambda b, k: (0, 0)),
                pl.BlockSpec(w2f.shape, lambda b, k: (0, 0)),
                pl.BlockSpec(b2c.shape, lambda b, k: (0, 0)),
            ],
            out_specs=pl.BlockSpec(
                (1, C, t_hw),
                lambda b, k: (b, 0, jnp.maximum(k - K, 0))),
            scratch_shapes=[
                pltpu.VMEM((C, 1), jnp.float32),   # pooled-sum accumulator
                pltpu.VMEM((C, 1), jnp.float32),   # sigmoid gate
            ],
        ),
        compiler_params=pltpu.CompilerParams(
            # Keep chunk (reduction) axis "arbitrary"; only batch is parallel.
            dimension_semantics=("parallel", "arbitrary"),
            vmem_limit_bytes=vmem_budget,
        ),
        cost_estimate=cost,
    )(x3, w1f, b1c, w2f, b2c)

    return out[:, :, :HW].reshape(B, C, H, W)


def se_layer_ref(x, w1, b1, w2, b2):
    """Pure-JAX reference replicating the PyTorch SELayer forward."""
    y = jnp.mean(x, axis=(2, 3))                  # AdaptiveAvgPool2d(1).view(b, c)
    y = y @ w1.T + b1                             # Linear(oup, hidden)
    y = y * jax.nn.sigmoid(y)                     # SiLU
    y = y @ w2.T + b2                             # Linear(hidden, oup)
    y = jax.nn.sigmoid(y)                         # Sigmoid
    return x * y[:, :, None, None]


if __name__ == "__main__":
    # SELayer(inp=4, oup=4, reduction=4): hidden = _make_divisible(4 // 4, 8) = 8
    B, inp, oup, reduction = 2, 4, 4, 4
    hidden = _make_divisible(inp // reduction, 8)

    key = jax.random.PRNGKey(0)
    kx, k1, kb1, k2, kb2, kx2, kx3 = jax.random.split(key, 7)

    bound1 = 1.0 / math.sqrt(oup)
    w1 = jax.random.uniform(k1, (hidden, oup), jnp.float32, -bound1, bound1)
    b1 = jax.random.uniform(kb1, (hidden,), jnp.float32, -bound1, bound1)
    bound2 = 1.0 / math.sqrt(hidden)
    w2 = jax.random.uniform(k2, (oup, hidden), jnp.float32, -bound2, bound2)
    b2 = jax.random.uniform(kb2, (oup,), jnp.float32, -bound2, bound2)

    # 1) Main case: 16x16 spatial (HW = 256) -> fused single-pass path.
    x = jax.random.normal(kx, (B, oup, 16, 16), dtype=jnp.float32)
    out = jax.block_until_ready(se_layer(x, w1, b1, w2, b2))
    ref = se_layer_ref(x, w1, b1, w2, b2)
    assert out.shape == x.shape
    assert jnp.allclose(out, ref, atol=1e-5, rtol=1e-5)

    # 2) Force the chunked two-pass path (K = 2) to exercise the accumulator.
    out2 = jax.block_until_ready(
        se_layer(x, w1, b1, w2, b2, slab_target_bytes=oup * 128 * 4))
    assert jnp.allclose(out2, ref, atol=1e-5, rtol=1e-5)

    # 3) Non-multiple-of-128 spatial size (7x7 -> lane-padded to 128).
    x3 = jax.random.normal(kx2, (B, oup, 7, 7), dtype=jnp.float32)
    out3 = jax.block_until_ready(se_layer(x3, w1, b1, w2, b2))
    ref3 = se_layer_ref(x3, w1, b1, w2, b2)
    assert jnp.allclose(out3, ref3, atol=1e-5, rtol=1e-5)

    # 4) Batch-tiled fused path (B = 8, 8x8 spatial -> Bt = 4, grid of 2).
    x4 = jax.random.normal(kx3, (8, oup, 8, 8), dtype=jnp.float32)
    out4 = jax.block_until_ready(se_layer(x4, w1, b1, w2, b2))
    ref4 = se_layer_ref(x4, w1, b1, w2, b2)
    assert jnp.allclose(out4, ref4, atol=1e-5, rtol=1e-5)

    print("KERNEL_OK")
</pallas_src>

<mosaic_0001>
module attributes {stable_mosaic.version = 11 : i64} {
  func.func @_se_kernel_fused(%arg0: i32, %arg1: memref<1x4x256xf32, #tpu.memory_space<vmem>>, %arg2: memref<4x8xf32, #tpu.memory_space<vmem>>, %arg3: memref<1x8xf32, #tpu.memory_space<vmem>>, %arg4: memref<8x4xf32, #tpu.memory_space<vmem>>, %arg5: memref<1x4xf32, #tpu.memory_space<vmem>>, %arg6: memref<1x4x256xf32, #tpu.memory_space<vmem>>) attributes {dimension_semantics = [#tpu.dimension_semantics<parallel>], iteration_bounds = array<i64: 2>, scalar_prefetch = 0 : i64, scratch_operands = 0 : i64, tpu.core_type = #tpu.core_type<tc>, window_params = [{transform_indices = @transform_0, window_bounds = array<i64: 1, 4, 256>}, {pipeline_mode = #tpu.pipeline_mode<synchronous>, transform_indices = @transform_1, window_bounds = array<i64: 4, 8>}, {pipeline_mode = #tpu.pipeline_mode<synchronous>, transform_indices = @transform_2, window_bounds = array<i64: 1, 8>}, {pipeline_mode = #tpu.pipeline_mode<synchronous>, transform_indices = @transform_3, window_bounds = array<i64: 8, 4>}, {pipeline_mode = #tpu.pipeline_mode<synchronous>, transform_indices = @transform_4, window_bounds = array<i64: 1, 4>}, {transform_indices = @transform_5, window_bounds = array<i64: 1, 4, 256>}]} {
    %c0 = arith.constant 0 : index
    %c0_0 = arith.constant 0 : index
    %c0_1 = arith.constant 0 : index
    %0 = vector.load %arg1[%c0, %c0_0, %c0_1] : memref<1x4x256xf32, #tpu.memory_space<vmem>>, vector<1x4x256xf32>
    %cst = arith.constant dense<0.000000e+00> : vector<1x4xf32>
    %1 = vector.multi_reduction <add>, %0, %cst [2] : vector<1x4x256xf32> to vector<1x4xf32>
    %cst_2 = arith.constant 3.906250e-03 : f32
    %2 = vector.broadcast %cst_2 : f32 to vector<1x4xf32>
    %3 = arith.mulf %1, %2 : vector<1x4xf32>
    %c0_3 = arith.constant 0 : index
    %c0_4 = arith.constant 0 : index
    %4 = vector.load %arg2[%c0_3, %c0_4] : memref<4x8xf32, #tpu.memory_space<vmem>>, vector<4x8xf32>
    %cst_5 = arith.constant dense<0.000000e+00> : vector<1x8xf32>
    %5 = tpu.matmul %3, %4, %cst_5 {dimension_numbers = #tpu.dot_dimension_numbers<[1], [0], [0], [1], [0, 0, 1, 1], [], []>} : vector<1x4xf32>, vector<4x8xf32>, vector<1x8xf32> -> vector<1x8xf32>
    %c0_6 = arith.constant 0 : index
    %c0_7 = arith.constant 0 : index
    %6 = vector.load %arg3[%c0_6, %c0_7] : memref<1x8xf32, #tpu.memory_space<vmem>>, vector<1x8xf32>
    %7 = arith.addf %5, %6 : vector<1x8xf32>
    %8 = arith.negf %7 : vector<1x8xf32>
    %9 = math.exp %8 : vector<1x8xf32>
    %cst_8 = arith.constant 1.000000e+00 : f32
    %10 = vector.broadcast %cst_8 : f32 to vector<1x8xf32>
    %11 = arith.addf %10, %9 : vector<1x8xf32>
    %12 = arith.divf %10, %11 : vector<1x8xf32>
    %13 = arith.mulf %7, %12 : vector<1x8xf32>
    %c0_9 = arith.constant 0 : index
    %c0_10 = arith.constant 0 : index
    %14 = vector.load %arg4[%c0_9, %c0_10] : memref<8x4xf32, #tpu.memory_space<vmem>>, vector<8x4xf32>
    %cst_11 = arith.constant dense<0.000000e+00> : vector<1x4xf32>
    %15 = tpu.matmul %13, %14, %cst_11 {dimension_numbers = #tpu.dot_dimension_numbers<[1], [0], [0], [1], [0, 0, 1, 1], [], []>} : vector<1x8xf32>, vector<8x4xf32>, vector<1x4xf32> -> vector<1x4xf32>
    %c0_12 = arith.constant 0 : index
    %c0_13 = arith.constant 0 : index
    %16 = vector.load %arg5[%c0_12, %c0_13] : memref<1x4xf32, #tpu.memory_space<vmem>>, vector<1x4xf32>
    %17 = arith.addf %15, %16 : vector<1x4xf32>
    %18 = arith.negf %17 : vector<1x4xf32>
    %19 = math.exp %18 : vector<1x4xf32>
    %cst_14 = arith.constant 1.000000e+00 : f32
    %20 = vector.broadcast %cst_14 : f32 to vector<1x4xf32>
    %21 = arith.addf %20, %19 : vector<1x4xf32>
    %22 = arith.divf %20, %21 : vector<1x4xf32>
    %23 = vector.shape_cast %22 : vector<1x4xf32> to vector<1x4x1xf32>
    %24 = vector.broadcast %23 : vector<1x4x1xf32> to vector<1x4x256xf32>
    %25 = arith.mulf %0, %24 : vector<1x4x256xf32>
    %c0_15 = arith.constant 0 : index
    %c0_16 = arith.constant 0 : index
    %c0_17 = arith.constant 0 : index
    %26 = vector.load %arg6[%c0_15, %c0_16, %c0_17] : memref<1x4x256xf32, #tpu.memory_space<vmem>>, vector<1x4x256xf32>
    tpu.vector_store %arg6[%c0_15, %c0_16, %c0_17], %25 {strides = array<i32>} : memref<1x4x256xf32, #tpu.memory_space<vmem>>, vector<1x4x256xf32>,
    return
  }
  func.func @transform_0(%arg0: i32) -> (i32, i32, i32) {
    %c0_i32 = arith.constant 0 : i32
    %c0_i32_0 = arith.constant 0 : i32
    %c0_i32_1 = arith.constant 0 : i32
    return %arg0, %c0_i32, %c0_i32_0 : i32, i32, i32
  }
  func.func @transform_1(%arg0: i32) -> (i32, i32) {
    %c0_i32 = arith.constant 0 : i32
    %c0_i32_0 = arith.constant 0 : i32
    %c0_i32_1 = arith.constant 0 : i32
    return %c0_i32, %c0_i32_0 : i32, i32
  }
  func.func @transform_2(%arg0: i32) -> (i32, i32) {
    %c0_i32 = arith.constant 0 : i32
    %c0_i32_0 = arith.constant 0 : i32
    %c0_i32_1 = arith.constant 0 : i32
    return %c0_i32, %c0_i32_0 : i32, i32
  }
  func.func @transform_3(%arg0: i32) -> (i32, i32) {
    %c0_i32 = arith.constant 0 : i32
    %c0_i32_0 = arith.constant 0 : i32
    %c0_i32_1 = arith.constant 0 : i32
    return %c0_i32, %c0_i32_0 : i32, i32
  }
  func.func @transform_4(%arg0: i32) -> (i32, i32) {
    %c0_i32 = arith.constant 0 : i32
    %c0_i32_0 = arith.constant 0 : i32
    %c0_i32_1 = arith.constant 0 : i32
    return %c0_i32, %c0_i32_0 : i32, i32
  }
  func.func @transform_5(%arg0: i32) -> (i32, i32, i32) {
    %c0_i32 = arith.constant 0 : i32
    %c0_i32_0 = arith.constant 0 : i32
    %c0_i32_1 = arith.constant 0 : i32
    return %arg0, %c0_i32, %c0_i32_0 : i32, i32, i32
  }
}

</mosaic_0001>

<llo_original>
// kernel: tpu_custom_call.1
$region0: #{tpu_custom_call.1}
  #allocation0 [shape = 'u32[]', space=smem, size = 0x4, offset = 0x4, fixed_abs, tag = 'smem constant byte address 0x4 - core index']
  #allocation1 [shape = 'u32[144,128]{1,0:T(1,128)}', space=vmem, size = 0x12000, scoped, tag = 'internal scratch']
  %s0 = inlined_call_operand.hbm [shape: f32[2,4,256], index: 0, kind: input, shape index: {}]
  %s1 = inlined_call_operand.vmem [shape: f32[4,8], index: 1, kind: input, shape index: {}]
  %s2 = inlined_call_operand.vmem [shape: f32[1,8], index: 2, kind: input, shape index: {}]
  %s3 = inlined_call_operand.vmem [shape: f32[8,4], index: 3, kind: input, shape index: {}]
  %s4 = inlined_call_operand.vmem [shape: f32[1,4], index: 4, kind: input, shape index: {}]
  %s5 = inlined_call_operand.hbm [shape: f32[2,4,256], index: 5, kind: output, shape index: {}]
  %s6 = sld [smem:[#allocation0]]
  $region57: #{tpu_custom_call.1} parent=0
    _
  %s8 = ssub.s32 1, %s6
  %s9 = scalar_select 0, %s8, %s6
  $region1: #{tpu_custom_call.1} parent=0
    #allocation2 [shape = 'u8[8192]{0}', space=vmem, size = 0x2000, scoped, tag = 'input window, operand 0']
    #allocation3 [shape = 's32[2]{0}', space=sflag, size = 0x8, scoped, tag = 'scoped memory for tpu_custom_call.1']
    #allocation4 [shape = 's32[2]{0}', space=sflag, size = 0x8, scoped, tag = 'scoped memory for tpu_custom_call.1']
    #allocation5 [shape = 'u8[8192]{0}', space=vmem, size = 0x2000, scoped, tag = 'output window, operand 0']
    %10 = vsyncpa [#allocation3], 0
    %s11 = scalar_lea.sflag [#allocation3], 1
    %12 = vsyncpa %s11, 0
    %13 = vsyncpa [#allocation4], 0
    %s14 = scalar_lea.sflag [#allocation4], 1
    %15 = vsyncpa %s14, 0
    loop: start=0, step=1, limit=4
    $region2: #{tpu_custom_call.1} parent=1 // loop_pre_header
      _
    $region3: #{tpu_custom_call.1} parent=1 // loop_header
      %s17 = sphi 0, %s21
      %p18 = scmp.ge.s32.totalorder %s17, 4
      %s27 = sphi 0, %s29
      %s30 = sphi 0, %s27
      %s31 = sphi 0, %s30
      %s47 = sphi 0, %s31
      %s51 = sphi 0, %s51
      %s53 = sphi 0, %s51
      %s54 = sphi 0, %s53
      %s68 = sphi 0, %s54
      %s72 = sphi 0, %s72
      %s74 = sphi 0, %s72
      %s75 = sphi 0, %s74
      %s89 = sphi 0, %s75
      %s93 = sphi 0, %s93
      %s95 = sphi 0, %s93
      %s96 = sphi 0, %s95
      %s110 = sphi 0, %s96
      %s114 = sphi 0, %s114
      %s116 = sphi 0, %s114
      %s117 = sphi 0, %s116
      %s131 = sphi 0, %s117
      %s137 = sphi 0, %s139
      %s140 = sphi 0, %s137
      %s141 = sphi 0, %s140
      %s157 = sphi 0, %s141
    $region4: #{tpu_custom_call.1} parent=1 // loop_header_branch
      %20 = sbr.rel (%p18) target = $region8
    $region5: #{tpu_custom_call.1} parent=1 // loop_body
      %s22 = ssub.s32 %s17, 1
      %s23 = ssub.s32 %s17, 2
      %s24 = sadd.s32 %s17, 1
      %s25 = ssub.s32 %s17, %s24
      %p26 = scmp.eq.s32.totalorder %s25, 0
      %s28 = sadd.s32 %s27, 1
      %s29 = scalar_select %p26, %s27, %s28
      %p32 = pneg %p26
      %p33 = scmp.eq.s32.totalorder %s17, 1
      %p34 = por %p32, %p33
      %p35 = scmp.ne.s32.totalorder %s27, %s30
      %p36 = scmp.eq.s32.totalorder %s17, 0
      %p37 = por %p35, %p36
      %p38 = scmp.ne.s32.totalorder %s27, %s30
      %p39 = scmp.eq.s32.totalorder %s22, 1
      %p40 = por %p38, %p39
      %p41 = scmp.ne.s32.totalorder %s30, %s31
      %p42 = scmp.eq.s32.totalorder %s22, 0
      %p43 = por %p41, %p42
      %p44 = scmp.ne.s32.totalorder %s30, %s31
      %p45 = scmp.eq.s32.totalorder %s23, 1
      %p46 = por %p44, %p45
      %p48 = scmp.ne.s32.totalorder %s31, %s47
      %p49 = scmp.eq.s32.totalorder %s23, 0
      %p50 = por %p48, %p49
      %s52 = sadd.s32 %s51, 1
      %p55 = scmp.eq.s32.totalorder %s17, 1
      %p56 = scmp.ne.s32.totalorder %s51, %s53
      %p57 = scmp.eq.s32.totalorder %s17, 0
      %p58 = por %p56, %p57
      %p59 = scmp.ne.s32.totalorder %s51, %s53
      %p60 = scmp.eq.s32.totalorder %s22, 1
      %p61 = por %p59, %p60
      %p62 = scmp.ne.s32.totalorder %s53, %s54
      %p63 = scmp.eq.s32.totalorder %s22, 0
      %p64 = por %p62, %p63
      %p65 = scmp.ne.s32.totalorder %s53, %s54
      %p66 = scmp.eq.s32.totalorder %s23, 1
      %p67 = por %p65, %p66
      %p69 = scmp.ne.s32.totalorder %s54, %s68
      %p70 = scmp.eq.s32.totalorder %s23, 0
      %p71 = por %p69, %p70
      %s73 = sadd.s32 %s72, 1
      %p76 = scmp.eq.s32.totalorder %s17, 1
      %p77 = scmp.ne.s32.totalorder %s72, %s74
      %p78 = scmp.eq.s32.totalorder %s17, 0
      %p79 = por %p77, %p78
      %p80 = scmp.ne.s32.totalorder %s72, %s74
      %p81 = scmp.eq.s32.totalorder %s22, 1
      %p82 = por %p80, %p81
      %p83 = scmp.ne.s32.totalorder %s74, %s75
      %p84 = scmp.eq.s32.totalorder %s22, 0
      %p85 = por %p83, %p84
      %p86 = scmp.ne.s32.totalorder %s74, %s75
      %p87 = scmp.eq.s32.totalorder %s23, 1
      %p88 = por %p86, %p87
      %p90 = scmp.ne.s32.totalorder %s75, %s89
      %p91 = scmp.eq.s32.totalorder %s23, 0
      %p92 = por %p90, %p91
      %s94 = sadd.s32 %s93, 1
      %p97 = scmp.eq.s32.totalorder %s17, 1
      %p98 = scmp.ne.s32.totalorder %s93, %s95
      %p99 = scmp.eq.s32.totalorder %s17, 0
      %p100 = por %p98, %p99
      %p101 = scmp.ne.s32.totalorder %s93, %s95
      %p102 = scmp.eq.s32.totalorder %s22, 1
      %p103 = por %p101, %p102
      %p104 = scmp.ne.s32.totalorder %s95, %s96
      %p105 = scmp.eq.s32.totalorder %s22, 0
      %p106 = por %p104, %p105
      %p107 = scmp.ne.s32.totalorder %s95, %s96
      %p108 = scmp.eq.s32.totalorder %s23, 1
      %p109 = por %p107, %p108
      %p111 = scmp.ne.s32.totalorder %s96, %s110
      %p112 = scmp.eq.s32.totalorder %s23, 0
      %p113 = por %p111, %p112
      %s115 = sadd.s32 %s114, 1
      %p118 = scmp.eq.s32.totalorder %s17, 1
      %p119 = scmp.ne.s32.totalorder %s114, %s116
      %p120 = scmp.eq.s32.totalorder %s17, 0
      %p121 = por %p119, %p120
      %p122 = scmp.ne.s32.totalorder %s114, %s116
      %p123 = scmp.eq.s32.totalorder %s22, 1
      %p124 = por %p122, %p123
      %p125 = scmp.ne.s32.totalorder %s116, %s117
      %p126 = scmp.eq.s32.totalorder %s22, 0
      %p127 = por %p125, %p126
      %p128 = scmp.ne.s32.totalorder %s116, %s117
      %p129 = scmp.eq.s32.totalorder %s23, 1
      %p130 = por %p128, %p129
      %p132 = scmp.ne.s32.totalorder %s117, %s131
      %p133 = scmp.eq.s32.totalorder %s23, 0
      %p134 = por %p132, %p133
      %s135 = ssub.s32 %s17, %s24
      %p136 = scmp.eq.s32.totalorder %s135, 0
      %s138 = sadd.s32 %s137, 1
      %s139 = scalar_select %p136, %s137, %s138
      %p142 = pneg %p136
      %p143 = scmp.eq.s32.totalorder %s17, 1
      %p144 = por %p142, %p143
      %p145 = scmp.ne.s32.totalorder %s137, %s140
      %p146 = scmp.eq.s32.totalorder %s17, 0
      %p147 = por %p145, %p146
      %p148 = scmp.ne.s32.totalorder %s137, %s140
      %p149 = scmp.eq.s32.totalorder %s22, 1
      %p150 = por %p148, %p149
      %p151 = scmp.ne.s32.totalorder %s140, %s141
      %p152 = scmp.eq.s32.totalorder %s22, 0
      %p153 = por %p151, %p152
      %p154 = scmp.ne.s32.totalorder %s140, %s141
      %p155 = scmp.eq.s32.totalorder %s23, 1
      %p156 = por %p154, %p155
      %p158 = scmp.ne.s32.totalorder %s141, %s157
      %p159 = scmp.eq.s32.totalorder %s23, 0
      %p160 = por %p158, %p159
      %p161 = scmp.le.s32.totalorder 1, %s17
      %p162 = scmp.lt.s32.totalorder %s17, 3
      %p163 = pnand %p161, %p162
      %p164 = pneg %p163
      // Predicated region
      $region9: #{tpu_custom_call.1} parent=5 // pred_check
        _
      $region10: #{tpu_custom_call.1} parent=5 // pred_check_branch
        %166 = sbr.rel (%p163) target = $region12
      $region11: #{tpu_custom_call.1} parent=5 // pred_region
        %s167 = ssub.s32 %s17, 1
        // Predicated region
        $region13: #{tpu_custom_call.1} parent=11 // pred_check
          %p168 = pneg %p64
        $region14: #{tpu_custom_call.1} parent=11 // pred_check_branch
          %170 = sbr.rel (%p168) target = $region16
        $region15: #{tpu_custom_call.1} parent=11 // pred_region
          _
        $region16: #{tpu_custom_call.1} parent=11 // pred_fallthru
          _
        // Predicated region
        $region17: #{tpu_custom_call.1} parent=11 // pred_check
          %p171 = pneg %p85
        $region18: #{tpu_custom_call.1} parent=11 // pred_check_branch
          %173 = sbr.rel (%p171) target = $region20
        $region19: #{tpu_custom_call.1} parent=11 // pred_region
          _
        $region20: #{tpu_custom_call.1} parent=11 // pred_fallthru
          _
        // Predicated region
        $region21: #{tpu_custom_call.1} parent=11 // pred_check
          %p174 = pneg %p106
        $region22: #{tpu_custom_call.1} parent=11 // pred_check_branch
          %176 = sbr.rel (%p174) target = $region24
        $region23: #{tpu_custom_call.1} parent=11 // pred_region
          _
        $region24: #{tpu_custom_call.1} parent=11 // pred_fallthru
          _
        // Predicated region
        $region25: #{tpu_custom_call.1} parent=11 // pred_check
          %p177 = pneg %p127
        $region26: #{tpu_custom_call.1} parent=11 // pred_check_branch
          %179 = sbr.rel (%p177) target = $region28
        $region27: #{tpu_custom_call.1} parent=11 // pred_region
          _
        $region28: #{tpu_custom_call.1} parent=11 // pred_fallthru
          _
      $region12: #{tpu_custom_call.1} parent=5 // pred_fallthru
        _
      %p180 = scmp.lt.s32.totalorder %s17, 2
      // Predicated region
      $region29: #{tpu_custom_call.1} parent=5 // pred_check
        %p181 = pneg %p180
      $region30: #{tpu_custom_call.1} parent=5 // pred_check_branch
        %183 = sbr.rel (%p181) target = $region32
      $region31: #{tpu_custom_call.1} parent=5 // pred_region
        // Predicated region
        $region33: #{tpu_custom_call.1} parent=31 // pred_check
          %p184 = pneg %p37
        $region34: #{tpu_custom_call.1} parent=31 // pred_check_branch
          %186 = sbr.rel (%p184) target = $region36
        $region35: #{tpu_custom_call.1} parent=31 // pred_region
          %s187 = sand.u32 %s27, 1
          %s188 = scalar_lea.sflag [#allocation3], %s187
          %s189 = sand.u32 %s27, 1
          %s190 = smul.addr %s189, 8
          %s191 = scalar_lea.vmem [#allocation2], %s190
          %s193 = ssub.s32 128, 128
          %194 = vsyncadd %s188, %s193
          %s195 = smul.addr %s17, 2
          %s196 = smul.addr %s195, 64
          %s197 = scalar_lea.hbm %s0, %s196
          %s199 = sshll.u32 %s191, 4
          %s200 = int_to_ptr.vmem [resolvable:$true] %s199
          %202 = dma.hbm_to_vmem [thread:$0]  %s197, 128, %s200, %s188
        $region36: #{tpu_custom_call.1} parent=31 // pred_fallthru
          _
      $region32: #{tpu_custom_call.1} parent=5 // pred_fallthru
        _
      %p203 = scmp.le.s32.totalorder 1, %s17
      %p204 = scmp.lt.s32.totalorder %s17, 3
      %p205 = pnand %p203, %p204
      %p206 = pneg %p205
      // Predicated region
      $region37: #{tpu_custom_call.1} parent=5 // pred_check
        _
      $region38: #{tpu_custom_call.1} parent=5 // pred_check_branch
        %208 = sbr.rel (%p205) target = $region40
      $region39: #{tpu_custom_call.1} parent=5 // pred_region
        %s209 = ssub.s32 %s17, 1
        %s210 = sand.u32 %s30, 1
        %s211 = scalar_lea.sflag [#allocation3], %s210
        %s212 = sand.u32 %s30, 1
        %s213 = smul.addr %s212, 8
        %s214 = scalar_lea.vmem [#allocation2], %s213
        // Predicated region
        $region41: #{tpu_custom_call.1} parent=39 // pred_check
          %p215 = pneg %p43
        $region42: #{tpu_custom_call.1} parent=39 // pred_check_branch
          %217 = sbr.rel (%p215) target = $region44
        $region43: #{tpu_custom_call.1} parent=39 // pred_region
          %218 = dma.done %s211, 128
        $region44: #{tpu_custom_call.1} parent=39 // pred_fallthru
          _
        %s219 = sand.u32 %s30, 1
        %s220 = scalar_lea.sflag [#allocation3], %s219
        %s221 = sand.u32 %s30, 1
        %s222 = smul.addr %s221, 8
        %s223 = scalar_lea.vmem [#allocation2], %s222
        %p224 = pneg %p43
        %p225 = pneg %p40
        %p226 = pneg %p64
        %p227 = pneg %p61
        %p228 = pneg %p85
        %p229 = pneg %p82
        %p230 = pneg %p106
        %p231 = pneg %p103
        %p232 = pneg %p127
        %p233 = pneg %p124
        %p234 = pneg %p153
        %p235 = pneg %p150
        %s236 = sand.u32 %s140, 1
        %s237 = scalar_lea.sflag [#allocation4], %s236
        %s238 = sand.u32 %s140, 1
        %s239 = smul.addr %s238, 8
        %s240 = scalar_lea.vmem [#allocation5], %s239
        %v241 = vld [vmem:[%s214] sm:$0xff]
        %v243 = vcombine.high %v241, %v241
        %vm245 = vcmask 1043456
        %v246 = vsel %vm245, %v241, 0.0
        %v247 = vsel %vm245, %v243, 0.0
        %v248 = vadd.f32 %v246, %v247
        %249 = vadd.xlane.f32.xlu0 %v248
        %v250 = vpop.xlane.xlu0 %249
        %v251 = vmul.f32 %v250, 0.00390625
        %v252 = vld [vmem:[%s1] sm:$0xf]
        %v253 = vld [vmem:[%s2] sm:$0x1]
        %v255 = vlaneseq
        %v256 = vand.u32 %v255, 127
        %v257 = vlaneseq
        %v258 = vshrl.u32 %v257, 7
        %v259 = vsub.s32 %v256, %v258
        %v260 = vrot.slane %v251, %v259
        %vm261 = vcmask 31744
        %v262 = vsel %vm261, %v260, 0
        %v265 = vsel %vm245, %v252, 0
        %267 = vmatprep.subr.mxu0 0.0
        %268 = vmatpush1.msra.mxu0 %v265
        %269 = vmatprep.subr.mxu0 0.0
        %270 = vmatpush1.msra.mxu0 0.0
        %271 = vmatprep.subr.mxu0 0.0
        %272 = vmatpush1.msra.mxu0 0.0
        %273 = vmatprep.subr.mxu0 0.0
        %274 = vmatpush1.msra.mxu0 0.0
        %275 = vmatprep.subr.mxu0 0.0
        %276 = vmatpush1.msra.mxu0 0.0
        %277 = vmatprep.subr.mxu0 0.0
        %278 = vmatpush1.msra.mxu0 0.0
        %279 = vmatprep.subr.mxu0 0.0
        %280 = vmatpush1.msra.mxu0 0.0
        %281 = vmatprep.subr.mxu0 0.0
        %282 = vmatpush1.msra.mxu0 0.0
        %283 = vmatprep.subr.mxu0 0.0
        %284 = vmatpush1.msra.mxu0 0.0
        %285 = vmatprep.subr.mxu0 0.0
        %286 = vmatpush1.msra.mxu0 0.0
        %287 = vmatprep.subr.mxu0 0.0
        %288 = vmatpush1.msra.mxu0 0.0
        %289 = vmatprep.subr.mxu0 0.0
        %290 = vmatpush1.msra.mxu0 0.0
        %291 = vmatprep.subr.mxu0 0.0
        %292 = vmatpush1.msra.mxu0 0.0
        %293 = vmatprep.subr.mxu0 0.0
        %294 = vmatpush1.msra.mxu0 0.0
        %295 = vmatprep.subr.mxu0 0.0
        %296 = vmatpush1.msra.mxu0 0.0
        %297 = vmatprep.subr.mxu0 0.0
        %298 = vmatpush1.msra.mxu0 0.0
        %299 = vmatprep.subr.mxu0 0.0
        %300 = vmatpush1.msra.mxu0 0.0
        %301 = vmatprep.subr.mxu0 0.0
        %302 = vmatpush1.msra.mxu0 0.0
        %303 = vmatprep.subr.mxu0 0.0
        %304 = vmatpush1.msra.mxu0 0.0
        %305 = vmatprep.subr.mxu0 0.0
        %306 = vmatpush1.msra.mxu0 0.0
        %307 = vmatprep.subr.mxu0 0.0
        %308 = vmatpush1.msra.mxu0 0.0
        %309 = vmatprep.subr.mxu0 0.0
        %310 = vmatpush1.msra.mxu0 0.0
        %311 = vmatprep.subr.mxu0 0.0
        %312 = vmatpush1.msra.mxu0 0.0
        %313 = vmatprep.subr.mxu0 0.0
        %314 = vmatpush1.msra.mxu0 0.0
        %315 = vmatprep.subr.mxu0 0.0
        %316 = vmatpush1.msra.mxu0 0.0
        %317 = vmatprep.subr.mxu0 0.0
        %318 = vmatpush1.msra.mxu0 0.0
        %319 = vmatprep.subr.mxu0 0.0
        %320 = vmatpush1.msra.mxu0 0.0
        %321 = vmatprep.subr.mxu0 0.0
        %322 = vmatpush1.msra.mxu0 0.0
        %323 = vmatprep.subr.mxu0 0.0
        %324 = vmatpush1.msra.mxu0 0.0
        %325 = vmatprep.subr.mxu0 0.0
        %326 = vmatpush1.msra.mxu0 0.0
        %327 = vmatprep.subr.mxu0 0.0
        %328 = vmatpush1.msra.mxu0 0.0
        %329 = vmatprep.subr.mxu0 0.0
        %330 = vmatpush1.msra.mxu0 0.0
        %331 = vmatprep.mubr.f32.mxu0 0.0
        %332 = vmatmul.mubr.f32.gmra.mrb[0].mxu0 %v262
        %v333 = vpop.f32.mrb[0].mxu0
        %v334 = vadd.f32 %v253, %v333
        %v335 = vpop.f32.mrb[0].mxu0
        %336 = vdwg.mxu0
        %v337 = vxor.u32 %v334, 2147483648
        %v338 = vmul.f32 %v337, 1.442695
        %v339 = vpow.pop %v338
        %v340 = vadd.f32 %v339, 1.0
        %v341 = vrcp.pop %v340
        %v342 = vmul.f32 1.0, %v341
        %v343 = vmul.f32 %v334, %v342
        %v344 = vld [vmem:[%s3] sm:$0xff]
        %v345 = vld [vmem:[%s4] sm:$0x1]
        %vm346 = vcmask 64512
        %v348 = vsel %vm346, %v343, 0
        %350 = vmatprep.subr.mxu0 0.0
        %351 = vmatpush1.msra.mxu0 %v344
        %352 = vmatprep.subr.mxu0 0.0
        %353 = vmatpush1.msra.mxu0 0.0
        %354 = vmatprep.subr.mxu0 0.0
        %355 = vmatpush1.msra.mxu0 0.0
        %356 = vmatprep.subr.mxu0 0.0
        %357 = vmatpush1.msra.mxu0 0.0
        %358 = vmatprep.subr.mxu0 0.0
        %359 = vmatpush1.msra.mxu0 0.0
        %360 = vmatprep.subr.mxu0 0.0
        %361 = vmatpush1.msra.mxu0 0.0
        %362 = vmatprep.subr.mxu0 0.0
        %363 = vmatpush1.msra.mxu0 0.0
        %364 = vmatprep.subr.mxu0 0.0
        %365 = vmatpush1.msra.mxu0 0.0
        %366 = vmatprep.subr.mxu0 0.0
        %367 = vmatpush1.msra.mxu0 0.0
        %368 = vmatprep.subr.mxu0 0.0
        %369 = vmatpush1.msra.mxu0 0.0
        %370 = vmatprep.subr.mxu0 0.0
        %371 = vmatpush1.msra.mxu0 0.0
        %372 = vmatprep.subr.mxu0 0.0
        %373 = vmatpush1.msra.mxu0 0.0
        %374 = vmatprep.subr.mxu0 0.0
        %375 = vmatpush1.msra.mxu0 0.0
        %376 = vmatprep.subr.mxu0 0.0
        %377 = vmatpush1.msra.mxu0 0.0
        %378 = vmatprep.subr.mxu0 0.0
        %379 = vmatpush1.msra.mxu0 0.0
        %380 = vmatprep.subr.mxu0 0.0
        %381 = vmatpush1.msra.mxu0 0.0
        %382 = vmatprep.subr.mxu0 0.0
        %383 = vmatpush1.msra.mxu0 0.0
        %384 = vmatprep.subr.mxu0 0.0
        %385 = vmatpush1.msra.mxu0 0.0
        %386 = vmatprep.subr.mxu0 0.0
        %387 = vmatpush1.msra.mxu0 0.0
        %388 = vmatprep.subr.mxu0 0.0
        %389 = vmatpush1.msra.mxu0 0.0
        %390 = vmatprep.subr.mxu0 0.0
        %391 = vmatpush1.msra.mxu0 0.0
        %392 = vmatprep.subr.mxu0 0.0
        %393 = vmatpush1.msra.mxu0 0.0
        %394 = vmatprep.subr.mxu0 0.0
        %395 = vmatpush1.msra.mxu0 0.0
        %396 = vmatprep.subr.mxu0 0.0
        %397 = vmatpush1.msra.mxu0 0.0
        %398 = vmatprep.subr.mxu0 0.0
        %399 = vmatpush1.msra.mxu0 0.0
        %400 = vmatprep.subr.mxu0 0.0
        %401 = vmatpush1.msra.mxu0 0.0
        %402 = vmatprep.subr.mxu0 0.0
        %403 = vmatpush1.msra.mxu0 0.0
        %404 = vmatprep.subr.mxu0 0.0
        %405 = vmatpush1.msra.mxu0 0.0
        %406 = vmatprep.subr.mxu0 0.0
        %407 = vmatpush1.msra.mxu0 0.0
        %408 = vmatprep.subr.mxu0 0.0
        %409 = vmatpush1.msra.mxu0 0.0
        %410 = vmatprep.subr.mxu0 0.0
        %411 = vmatpush1.msra.mxu0 0.0
        %412 = vmatprep.subr.mxu0 0.0
        %413 = vmatpush1.msra.mxu0 0.0
        %414 = vmatprep.mubr.f32.mxu0 0.0
        %415 = vmatmul.mubr.f32.gmra.mrb[0].mxu0 %v348
        %v416 = vpop.f32.mrb[0].mxu0
        %v417 = vadd.f32 %v345, %v416
        %v418 = vpop.f32.mrb[0].mxu0
        %419 = vdwg.mxu0
        %v420 = vxor.u32 %v417, 2147483648
        %v421 = vmul.f32 %v420, 1.442695
        %v422 = vpow.pop %v421
        %v423 = vadd.f32 %v422, 1.0
        %v424 = vrcp.pop %v423
        %v425 = vmul.f32 1.0, %v424
        %v426 = vlaneseq
        %v427 = vshrl.u32 %v426, 7
        %v428 = vsub.s32 0, %v427
        %v429 = vrot.slane %v425, %v428
        %431 = vbcast.lane.b32.xlu0 %v429, 256
        %v432 = vpop.permute.xlu0 %431
        %v435 = vunpack.c.l.s4 839922192
        %v436 = vunpack.c.0.s8 %v435
        %v437 = vlaneseq
        %v438 = vshrl.u32 %v437, 7
        %v439 = vsub.s32 %v436, %v438
        %v440 = vrot.slane %v432, %v439
        %v442 = vmul.f32 %v241, %v440
        %443 = vst [vmem:[%s240] sm:$0xff] %v442
        %s444 = sand.u32 %s140, 1
        %s445 = scalar_lea.sflag [#allocation4], %s444
        %s446 = sand.u32 %s140, 1
        %s447 = smul.addr %s446, 8
        %s448 = scalar_lea.vmem [#allocation5], %s447
        // Predicated region
        $region45: #{tpu_custom_call.1} parent=39 // pred_check
          %p449 = pneg %p150
        $region46: #{tpu_custom_call.1} parent=39 // pred_check_branch
          %451 = sbr.rel (%p449) target = $region48
        $region47: #{tpu_custom_call.1} parent=39 // pred_region
          %s453 = ssub.s32 128, 128
          %454 = vsyncadd %s445, %s453
          %s455 = smul.addr %s22, 2
          %s456 = smul.addr %s455, 64
          %s457 = scalar_lea.hbm %s5, %s456
          %s459 = sshll.u32 %s448, 4
          %s460 = int_to_ptr.vmem [resolvable:$true] %s459
          %462 = dma.vmem_to_hbm [thread:$0]  %s460, 128, %s457, %s445
        $region48: #{tpu_custom_call.1} parent=39 // pred_fallthru
          _
      $region40: #{tpu_custom_call.1} parent=5 // pred_fallthru
        _
      %p463 = scmp.le.s32.totalorder 2, %s17
      // Predicated region
      $region49: #{tpu_custom_call.1} parent=5 // pred_check
        %p464 = pneg %p463
      $region50: #{tpu_custom_call.1} parent=5 // pred_check_branch
        %466 = sbr.rel (%p464) target = $region52
      $region51: #{tpu_custom_call.1} parent=5 // pred_region
        %s467 = ssub.s32 %s17, 2
        // Predicated region
        $region53: #{tpu_custom_call.1} parent=51 // pred_check
          %p468 = pneg %p156
        $region54: #{tpu_custom_call.1} parent=51 // pred_check_branch
          %470 = sbr.rel (%p468) target = $region56
        $region55: #{tpu_custom_call.1} parent=51 // pred_region
          %s471 = sand.u32 %s141, 1
          %s472 = scalar_lea.sflag [#allocation4], %s471
          %s473 = sand.u32 %s141, 1
          %s474 = smul.addr %s473, 8
          %s475 = scalar_lea.vmem [#allocation5], %s474
          %476 = dma.done %s472, 128
        $region56: #{tpu_custom_call.1} parent=51 // pred_fallthru
          _
      $region52: #{tpu_custom_call.1} parent=5 // pred_fallthru
        _
    $region6: #{tpu_custom_call.1} parent=1 // loop_footer
      %s21 = sadd.s32 1, %s17
    $region7: #{tpu_custom_call.1} parent=1 // loop_footer_branch
      %16 = sbr.rel target = $region3
    $region8: #{tpu_custom_call.1} parent=1 // loop_exit
      _
    %477 = vsyncpa [#allocation3], 1
    %s478 = scalar_lea.sflag [#allocation3], 1
    %479 = vsyncpa %s478, 1
    %480 = vsyncpa [#allocation4], 1
    %s481 = scalar_lea.sflag [#allocation4], 1
    %482 = vsyncpa %s481, 1

</llo_original>
